<compile_context>
chip_gen: v7x
topology: tpu7x:2x2x1
jax: 0.10.0
libtpu: 0.0.40
codegen_flags: <defaults>
</compile_context>

<pallas_src>
import jax
import jax.numpy as jnp
from jax.experimental import pallas as pl
from jax.experimental.pallas import tpu as pltpu

N_LATENT = 3
N_OUT_PAD = 128      # lane-dense padded head width
MAX_TM = 512         # batch tile (rows fed to the MXU per grid step)


def _round_up(x, m):
    return ((x + m - 1) // m) * m


def _mlp_kernel(c_ref, w1_ref, b1_ref, w2_ref, b2_ref, w3_ref, b3_ref, out_ref):
    # Layer 1: (TM, dim)bf16 @ (dim, 32)bf16 -> f32 acc, bias + ReLU in f32
    h1 = jnp.dot(c_ref[...], w1_ref[...], preferred_element_type=jnp.float32)
    h1 = jnp.maximum(h1 + b1_ref[...], 0.0)
    # Layer 2: (TM, 32) @ (32, 64) -> f32 acc, bias + ReLU in f32
    h2 = jnp.dot(h1.astype(w2_ref.dtype), w2_ref[...],
                 preferred_element_type=jnp.float32)
    h2 = jnp.maximum(h2 + b2_ref[...], 0.0)
    # Output head (padded to 128 lanes): (TM, 64) @ (64, 128) + (1, 128)
    mu = jnp.dot(h2.astype(w3_ref.dtype), w3_ref[...],
                 preferred_element_type=jnp.float32)
    out_ref[...] = (mu + b3_ref[...]).astype(out_ref.dtype)


def active_learning_forward(c, params, *, max_tm=MAX_TM):
    """c: (B, dim) float32.  params: dict of pre-transposed weights / biases."""
    B, dim = c.shape

    # Batch tile: multiple of 8, capped at max_tm; pad batch to a tile multiple.
    TM = min(max_tm, _round_up(B, 8))
    Bp = _round_up(B, TM)
    if Bp != B:
        c = jnp.pad(c, ((0, Bp - B), (0, 0)))

    # bf16 MXU inputs, f32 elementwise / accumulation.
    c_bf = c.astype(jnp.bfloat16)
    w1 = params["w1"].astype(jnp.bfloat16)
    w2 = params["w2"].astype(jnp.bfloat16)
    w3 = params["w3"].astype(jnp.bfloat16)
    b1 = params["b1"].astype(jnp.float32)
    b2 = params["b2"].astype(jnp.float32)
    b3 = params["b3"].astype(jnp.float32)

    # Pad the 3-wide head to 128 lanes so the output store is lane-dense.
    w3p = jnp.pad(w3, ((0, 0), (0, N_OUT_PAD - w3.shape[1])))
    b3p = jnp.pad(b3, ((0, 0), (0, N_OUT_PAD - b3.shape[1])))

    def const_spec(arr):
        # Full-array, VMEM-resident across all grid steps.
        return pl.BlockSpec(arr.shape, lambda i: (0, 0))

    out = pl.pallas_call(
        _mlp_kernel,
        out_shape=jax.ShapeDtypeStruct((Bp, N_OUT_PAD), jnp.float32),
        grid=(Bp // TM,),
        in_specs=[
            pl.BlockSpec((TM, dim), lambda i: (i, 0)),   # streamed batch tiles
            const_spec(w1), const_spec(b1),
            const_spec(w2), const_spec(b2),
            const_spec(w3p), const_spec(b3p),
        ],
        out_specs=pl.BlockSpec((TM, N_OUT_PAD), lambda i: (i, 0)),
        compiler_params=pltpu.CompilerParams(
            dimension_semantics=("parallel",)),          # megacore on v7x
    )(c_bf, w1, b1, w2, b2, w3p, b3p)

    return out[:B, :N_LATENT]


def init_params(dim, key):
    """Deterministic synthetic init matching the module's parameter shapes.

    PyTorch shapes: Linear(dim,32).weight (32,dim), Linear(32,64).weight (64,32),
    Linear(64,3).weight (3,64).  We store them transposed as (in, out).
    """
    k1, k2, k3, k4, k5, k6 = jax.random.split(key, 6)

    def uinit(k, fan_in, shape):
        bound = 1.0 / jnp.sqrt(fan_in)
        return jax.random.uniform(k, shape, jnp.float32, -bound, bound)

    return {
        "w1": uinit(k1, dim, (dim, 32)),
        "b1": uinit(k2, dim, (1, 32)),
        "w2": uinit(k3, 32, (32, 64)),
        "b2": uinit(k4, 32, (1, 64)),
        "w3": uinit(k5, 64, (64, N_LATENT)),
        "b3": uinit(k6, 64, (1, N_LATENT)),
    }


def reference_forward(c, params):
    """JAX reference with the same bf16 matmul-input quantization as the kernel."""
    f32 = jnp.float32
    bf = lambda x: x.astype(jnp.bfloat16).astype(f32)
    h1 = jnp.maximum(bf(c) @ bf(params["w1"]) + params["b1"], 0.0)
    h2 = jnp.maximum(bf(h1) @ bf(params["w2"]) + params["b2"], 0.0)
    return bf(h2) @ bf(params["w3"]) + params["b3"]


if __name__ == "__main__":
    key = jax.random.PRNGKey(0)
    k_params, k_c1, k_c2 = jax.random.split(key, 3)

    DIM = 16
    params = init_params(DIM, k_params)

    # Small shape (single grid step).
    B = 8
    c = jax.random.normal(k_c1, (B, DIM), dtype=jnp.float32)
    mu = jax.block_until_ready(active_learning_forward(c, params))
    ref = reference_forward(c, params)
    assert mu.shape == (B, N_LATENT)
    assert jnp.allclose(mu, ref, atol=1e-4, rtol=1e-4), "mismatch (B=8)"

    # Larger, non-tile-multiple batch: exercises the grid + padding path.
    B2 = 1000
    c2 = jax.random.normal(k_c2, (B2, DIM), dtype=jnp.float32)
    mu2 = jax.block_until_ready(active_learning_forward(c2, params))
    ref2 = reference_forward(c2, params)
    assert mu2.shape == (B2, N_LATENT)
    assert jnp.allclose(mu2, ref2, atol=1e-4, rtol=1e-4), "mismatch (B=1000)"

    print("KERNEL_OK")
</pallas_src>

<mosaic_0001>
module attributes {stable_mosaic.version = 11 : i64} {
  func.func @_mlp_kernel(%arg0: i32, %arg1: memref<8x16xbf16, #tpu.memory_space<vmem>>, %arg2: memref<16x32xbf16, #tpu.memory_space<vmem>>, %arg3: memref<1x32xf32, #tpu.memory_space<vmem>>, %arg4: memref<32x64xbf16, #tpu.memory_space<vmem>>, %arg5: memref<1x64xf32, #tpu.memory_space<vmem>>, %arg6: memref<64x128xbf16, #tpu.memory_space<vmem>>, %arg7: memref<1x128xf32, #tpu.memory_space<vmem>>, %arg8: memref<8x128xf32, #tpu.memory_space<vmem>>) attributes {dimension_semantics = [#tpu.dimension_semantics<parallel>], iteration_bounds = array<i64: 1>, scalar_prefetch = 0 : i64, scratch_operands = 0 : i64, tpu.core_type = #tpu.core_type<tc>, window_params = [{transform_indices = @transform_0, window_bounds = array<i64: 8, 16>}, {pipeline_mode = #tpu.pipeline_mode<synchronous>, transform_indices = @transform_1, window_bounds = array<i64: 16, 32>}, {pipeline_mode = #tpu.pipeline_mode<synchronous>, transform_indices = @transform_2, window_bounds = array<i64: 1, 32>}, {pipeline_mode = #tpu.pipeline_mode<synchronous>, transform_indices = @transform_3, window_bounds = array<i64: 32, 64>}, {pipeline_mode = #tpu.pipeline_mode<synchronous>, transform_indices = @transform_4, window_bounds = array<i64: 1, 64>}, {pipeline_mode = #tpu.pipeline_mode<synchronous>, transform_indices = @transform_5, window_bounds = array<i64: 64, 128>}, {pipeline_mode = #tpu.pipeline_mode<synchronous>, transform_indices = @transform_6, window_bounds = array<i64: 1, 128>}, {transform_indices = @transform_7, window_bounds = array<i64: 8, 128>}]} {
    %c0 = arith.constant 0 : index
    %c0_0 = arith.constant 0 : index
    %0 = vector.load %arg1[%c0, %c0_0] : memref<8x16xbf16, #tpu.memory_space<vmem>>, vector<8x16xbf16>
    %c0_1 = arith.constant 0 : index
    %c0_2 = arith.constant 0 : index
    %1 = vector.load %arg2[%c0_1, %c0_2] : memref<16x32xbf16, #tpu.memory_space<vmem>>, vector<16x32xbf16>
    %cst = arith.constant dense<0.000000e+00> : vector<8x32xf32>
    %2 = tpu.matmul %0, %1, %cst {dimension_numbers = #tpu.dot_dimension_numbers<[1], [0], [0], [1], [0, 0, 1, 1], [], []>} : vector<8x16xbf16>, vector<16x32xbf16>, vector<8x32xf32> -> vector<8x32xf32>
    %c0_3 = arith.constant 0 : index
    %c0_4 = arith.constant 0 : index
    %3 = vector.load %arg3[%c0_3, %c0_4] : memref<1x32xf32, #tpu.memory_space<vmem>>, vector<1x32xf32>
    %4 = vector.broadcast %3 : vector<1x32xf32> to vector<8x32xf32>
    %5 = arith.addf %2, %4 : vector<8x32xf32>
    %cst_5 = arith.constant 0.000000e+00 : f32
    %6 = vector.broadcast %cst_5 : f32 to vector<8x32xf32>
    %7 = arith.maximumf %5, %6 : vector<8x32xf32>
    %8 = arith.truncf %7 : vector<8x32xf32> to vector<8x32xbf16>
    %c0_6 = arith.constant 0 : index
    %c0_7 = arith.constant 0 : index
    %9 = vector.load %arg4[%c0_6, %c0_7] : memref<32x64xbf16, #tpu.memory_space<vmem>>, vector<32x64xbf16>
    %cst_8 = arith.constant dense<0.000000e+00> : vector<8x64xf32>
    %10 = tpu.matmul %8, %9, %cst_8 {dimension_numbers = #tpu.dot_dimension_numbers<[1], [0], [0], [1], [0, 0, 1, 1], [], []>} : vector<8x32xbf16>, vector<32x64xbf16>, vector<8x64xf32> -> vector<8x64xf32>
    %c0_9 = arith.constant 0 : index
    %c0_10 = arith.constant 0 : index
    %11 = vector.load %arg5[%c0_9, %c0_10] : memref<1x64xf32, #tpu.memory_space<vmem>>, vector<1x64xf32>
    %12 = vector.broadcast %11 : vector<1x64xf32> to vector<8x64xf32>
    %13 = arith.addf %10, %12 : vector<8x64xf32>
    %cst_11 = arith.constant 0.000000e+00 : f32
    %14 = vector.broadcast %cst_11 : f32 to vector<8x64xf32>
    %15 = arith.maximumf %13, %14 : vector<8x64xf32>
    %16 = arith.truncf %15 : vector<8x64xf32> to vector<8x64xbf16>
    %c0_12 = arith.constant 0 : index
    %c0_13 = arith.constant 0 : index
    %17 = vector.load %arg6[%c0_12, %c0_13] : memref<64x128xbf16, #tpu.memory_space<vmem>>, vector<64x128xbf16>
    %cst_14 = arith.constant dense<0.000000e+00> : vector<8x128xf32>
    %18 = tpu.matmul %16, %17, %cst_14 {dimension_numbers = #tpu.dot_dimension_numbers<[1], [0], [0], [1], [0, 0, 1, 1], [], []>} : vector<8x64xbf16>, vector<64x128xbf16>, vector<8x128xf32> -> vector<8x128xf32>
    %c0_15 = arith.constant 0 : index
    %c0_16 = arith.constant 0 : index
    %19 = vector.load %arg7[%c0_15, %c0_16] : memref<1x128xf32, #tpu.memory_space<vmem>>, vector<1x128xf32>
    %20 = vector.broadcast %19 : vector<1x128xf32> to vector<8x128xf32>
    %21 = arith.addf %18, %20 : vector<8x128xf32>
    %c0_17 = arith.constant 0 : index
    %c0_18 = arith.constant 0 : index
    %22 = vector.load %arg8[%c0_17, %c0_18] : memref<8x128xf32, #tpu.memory_space<vmem>>, vector<8x128xf32>
    tpu.vector_store %arg8[%c0_17, %c0_18], %21 {strides = array<i32>} : memref<8x128xf32, #tpu.memory_space<vmem>>, vector<8x128xf32>,
    return
  }
  func.func @transform_0(%arg0: i32) -> (i32, i32) {
    %c0_i32 = arith.constant 0 : i32
    %c0_i32_0 = arith.constant 0 : i32
    return %arg0, %c0_i32 : i32, i32
  }
  func.func @transform_1(%arg0: i32) -> (i32, i32) {
    %c0_i32 = arith.constant 0 : i32
    %c0_i32_0 = arith.constant 0 : i32
    %c0_i32_1 = arith.constant 0 : i32
    return %c0_i32, %c0_i32_0 : i32, i32
  }
  func.func @transform_2(%arg0: i32) -> (i32, i32) {
    %c0_i32 = arith.constant 0 : i32
    %c0_i32_0 = arith.constant 0 : i32
    %c0_i32_1 = arith.constant 0 : i32
    return %c0_i32, %c0_i32_0 : i32, i32
  }
  func.func @transform_3(%arg0: i32) -> (i32, i32) {
    %c0_i32 = arith.constant 0 : i32
    %c0_i32_0 = arith.constant 0 : i32
    %c0_i32_1 = arith.constant 0 : i32
    return %c0_i32, %c0_i32_0 : i32, i32
  }
  func.func @transform_4(%arg0: i32) -> (i32, i32) {
    %c0_i32 = arith.constant 0 : i32
    %c0_i32_0 = arith.constant 0 : i32
    %c0_i32_1 = arith.constant 0 : i32
    return %c0_i32, %c0_i32_0 : i32, i32
  }
  func.func @transform_5(%arg0: i32) -> (i32, i32) {
    %c0_i32 = arith.constant 0 : i32
    %c0_i32_0 = arith.constant 0 : i32
    %c0_i32_1 = arith.constant 0 : i32
    return %c0_i32, %c0_i32_0 : i32, i32
  }
  func.func @transform_6(%arg0: i32) -> (i32, i32) {
    %c0_i32 = arith.constant 0 : i32
    %c0_i32_0 = arith.constant 0 : i32
    %c0_i32_1 = arith.constant 0 : i32
    return %c0_i32, %c0_i32_0 : i32, i32
  }
  func.func @transform_7(%arg0: i32) -> (i32, i32) {
    %c0_i32 = arith.constant 0 : i32
    %c0_i32_0 = arith.constant 0 : i32
    return %arg0, %c0_i32 : i32, i32
  }
}

</mosaic_0001>

<llo_original>
// kernel: tpu_custom_call.1
$region0: #{tpu_custom_call.1}
  #allocation0 [shape = 'u32[]', space=smem, size = 0x4, offset = 0x4, fixed_abs, tag = 'smem constant byte address 0x4 - core index']
  #allocation1 [shape = 'u32[144,128]{1,0:T(1,128)}', space=vmem, size = 0x12000, scoped, tag = 'internal scratch']
  %s0 = inlined_call_operand.hbm [shape: bf16[8,16], index: 0, kind: input, shape index: {}]
  %s1 = inlined_call_operand.hbm [shape: bf16[16,32], index: 1, kind: input, shape index: {}]
  %s2 = inlined_call_operand.vmem [shape: f32[1,32], index: 2, kind: input, shape index: {}]
  %s3 = inlined_call_operand.hbm [shape: bf16[32,64], index: 3, kind: input, shape index: {}]
  %s4 = inlined_call_operand.vmem [shape: f32[1,64], index: 4, kind: input, shape index: {}]
  %s5 = inlined_call_operand.hbm [shape: bf16[64,128], index: 5, kind: input, shape index: {}]
  %s6 = inlined_call_operand.vmem [shape: f32[1,128], index: 6, kind: input, shape index: {}]
  %s7 = inlined_call_operand.hbm [shape: f32[8,128], index: 7, kind: output, shape index: {}]
  %s8 = sld [smem:[#allocation0]]
  $region54: #{tpu_custom_call.1} parent=0
    _
  %s10 = ssub.s32 1, %s8
  %s11 = scalar_select 0, %s10, %s8
  $region1: #{tpu_custom_call.1} parent=0
    #allocation2 [shape = 'u8[2048]{0}', space=vmem, size = 0x800, scoped, tag = 'input window, operand 0, single buffered']
    #allocation3 [shape = 's32[1]{0}', space=sflag, size = 0x4, scoped, tag = 'scoped memory for tpu_custom_call.1']
    #allocation4 [shape = 's32[1]{0}', space=sflag, size = 0x4, scoped, tag = 'scoped memory for tpu_custom_call.1']
    #allocation5 [shape = 'u8[4096]{0}', space=vmem, size = 0x1000, scoped, tag = 'input window, operand 1, single buffered']
    #allocation6 [shape = 's32[1]{0}', space=sflag, size = 0x4, scoped, tag = 'scoped memory for tpu_custom_call.1']
    #allocation7 [shape = 'u8[8192]{0}', space=vmem, size = 0x2000, scoped, tag = 'input window, operand 3, single buffered']
    #allocation8 [shape = 'u8[16384]{0}', space=vmem, size = 0x4000, scoped, tag = 'input window, operand 5, single buffered']
    #allocation9 [shape = 's32[1]{0}', space=sflag, size = 0x4, scoped, tag = 'scoped memory for tpu_custom_call.1']
    #allocation10 [shape = 'u8[4096]{0}', space=vmem, size = 0x1000, scoped, tag = 'output window, operand 0, single buffered']
    %12 = vsyncpa [#allocation3], 0
    %13 = vsyncpa [#allocation6], 0
    %14 = vsyncpa [#allocation9], 0
    %15 = vsyncpa [#allocation4], 0
    // Predicated region
    $region2: #{tpu_custom_call.1} parent=1 // pred_check
      _
    $region3: #{tpu_custom_call.1} parent=1 // pred_check_branch
      %17 = sbr.rel (0) target = $region5
    $region4: #{tpu_custom_call.1} parent=1 // pred_region
      %s19 = ssub.s32 64, 64
      %20 = vsyncadd [#allocation3], %s19
      %s22 = sshll.u32 [#allocation2], 4
      %s23 = int_to_ptr.vmem [resolvable:$true] %s22
      %25 = dma.hbm_to_vmem [thread:$0]  %s0, 64, %s23, [#allocation3]
    $region5: #{tpu_custom_call.1} parent=1 // pred_fallthru
      _
    // Predicated region
    $region6: #{tpu_custom_call.1} parent=1 // pred_check
      _
    $region7: #{tpu_custom_call.1} parent=1 // pred_check_branch
      %27 = sbr.rel (0) target = $region9
    $region8: #{tpu_custom_call.1} parent=1 // pred_region
      %s29 = ssub.s32 128, 128
      %30 = vsyncadd [#allocation6], %s29
      %s31 = sshll.u32 [#allocation5], 4
      %s32 = int_to_ptr.vmem [resolvable:$true] %s31
      %37 = dma.hbm_to_vmem [thread:$0]  %s1, 128, %s32, [#allocation6], 64, 64, 4
    $region9: #{tpu_custom_call.1} parent=1 // pred_fallthru
      _
    // Predicated region
    $region10: #{tpu_custom_call.1} parent=1 // pred_check
      _
    $region11: #{tpu_custom_call.1} parent=1 // pred_check_branch
      %39 = sbr.rel (0) target = $region13
    $region12: #{tpu_custom_call.1} parent=1 // pred_region
      _
    $region13: #{tpu_custom_call.1} parent=1 // pred_fallthru
      _
    // Predicated region
    $region14: #{tpu_custom_call.1} parent=1 // pred_check
      _
    $region15: #{tpu_custom_call.1} parent=1 // pred_check_branch
      %41 = sbr.rel (0) target = $region17
    $region16: #{tpu_custom_call.1} parent=1 // pred_region
      %s43 = ssub.s32 256, 256
      %44 = vsyncadd [#allocation6], %s43
      %s45 = sshll.u32 [#allocation7], 4
      %s46 = int_to_ptr.vmem [resolvable:$true] %s45
      %51 = dma.hbm_to_vmem [thread:$0]  %s3, 256, %s46, [#allocation6], 64, 64, 4
    $region17: #{tpu_custom_call.1} parent=1 // pred_fallthru
      _
    // Predicated region
    $region18: #{tpu_custom_call.1} parent=1 // pred_check
      _
    $region19: #{tpu_custom_call.1} parent=1 // pred_check_branch
      %53 = sbr.rel (0) target = $region21
    $region20: #{tpu_custom_call.1} parent=1 // pred_region
      _
    $region21: #{tpu_custom_call.1} parent=1 // pred_fallthru
      _
    // Predicated region
    $region22: #{tpu_custom_call.1} parent=1 // pred_check
      _
    $region23: #{tpu_custom_call.1} parent=1 // pred_check_branch
      %55 = sbr.rel (0) target = $region25
    $region24: #{tpu_custom_call.1} parent=1 // pred_region
      %s57 = ssub.s32 512, 512
      %58 = vsyncadd [#allocation9], %s57
      %s59 = sshll.u32 [#allocation8], 4
      %s60 = int_to_ptr.vmem [resolvable:$true] %s59
      %65 = dma.hbm_to_vmem [thread:$0]  %s5, 512, %s60, [#allocation9], 64, 64, 4
    $region25: #{tpu_custom_call.1} parent=1 // pred_fallthru
      _
    // Predicated region
    $region26: #{tpu_custom_call.1} parent=1 // pred_check
      _
    $region27: #{tpu_custom_call.1} parent=1 // pred_check_branch
      %67 = sbr.rel (0) target = $region29
    $region28: #{tpu_custom_call.1} parent=1 // pred_region
      _
    $region29: #{tpu_custom_call.1} parent=1 // pred_fallthru
      _
    // Predicated region
    $region30: #{tpu_custom_call.1} parent=1 // pred_check
      _
    $region31: #{tpu_custom_call.1} parent=1 // pred_check_branch
      %69 = sbr.rel (0) target = $region33
    $region32: #{tpu_custom_call.1} parent=1 // pred_region
      %70 = dma.done [#allocation3], 64
    $region33: #{tpu_custom_call.1} parent=1 // pred_fallthru
      _
    // Predicated region
    $region34: #{tpu_custom_call.1} parent=1 // pred_check
      _
    $region35: #{tpu_custom_call.1} parent=1 // pred_check_branch
      %72 = sbr.rel (0) target = $region37
    $region36: #{tpu_custom_call.1} parent=1 // pred_region
      %73 = dma.done [#allocation6], 128
    $region37: #{tpu_custom_call.1} parent=1 // pred_fallthru
      _
    // Predicated region
    $region38: #{tpu_custom_call.1} parent=1 // pred_check
      _
    $region39: #{tpu_custom_call.1} parent=1 // pred_check_branch
      %75 = sbr.rel (0) target = $region41
    $region40: #{tpu_custom_call.1} parent=1 // pred_region
      %76 = dma.done [#allocation6], 256
    $region41: #{tpu_custom_call.1} parent=1 // pred_fallthru
      _
    // Predicated region
    $region42: #{tpu_custom_call.1} parent=1 // pred_check
      _
    $region43: #{tpu_custom_call.1} parent=1 // pred_check_branch
      %78 = sbr.rel (0) target = $region45
    $region44: #{tpu_custom_call.1} parent=1 // pred_region
      %79 = dma.done [#allocation9], 512
    $region45: #{tpu_custom_call.1} parent=1 // pred_fallthru
      _
    %v81 = vld [vmem:[#allocation2] sm:$0xf]
    %v82 = vld [vmem:[#allocation5] sm:$0xf]
    %v83 = vld [vmem:[#allocation5 + $0x4] sm:$0xf]
    %v84 = vld [vmem:[%s2] sm:$0x1]
    %v86 = vlaneseq
    %v87 = vshrl.u32 %v86, 7
    %v88 = vsub.s32 0, %v87
    %v89 = vrot.slane %v84, %v88
    %v93 = vunpack.c.l.b16 %v82
    %v94 = vunpack.c.l.b16 %v83
    %v95 = vpack.c.b16 %v94, %v93
    %vm97 = vcmask 130048
    %v99 = vsel %vm97, %v81, 0
    %101 = vmatprep.subr.bf16.mxu0 0
    %102 = vmatpush1.bf16.msra.mxu0 %v95
    %103 = vmatprep.subr.bf16.mxu0 0
    %104 = vmatpush1.bf16.msra.mxu0 0
    %105 = vmatprep.subr.bf16.mxu0 0
    %106 = vmatpush1.bf16.msra.mxu0 0
    %107 = vmatprep.subr.bf16.mxu0 0
    %108 = vmatpush1.bf16.msra.mxu0 0
    %109 = vmatprep.subr.bf16.mxu0 0
    %110 = vmatpush1.bf16.msra.mxu0 0
    %111 = vmatprep.subr.bf16.mxu0 0
    %112 = vmatpush1.bf16.msra.mxu0 0
    %113 = vmatprep.subr.bf16.mxu0 0
    %114 = vmatpush1.bf16.msra.mxu0 0
    %115 = vmatprep.subr.bf16.mxu0 0
    %116 = vmatpush1.bf16.msra.mxu0 0
    %117 = vmatprep.subr.bf16.mxu0 0
    %118 = vmatpush1.bf16.msra.mxu0 0
    %119 = vmatprep.subr.bf16.mxu0 0
    %120 = vmatpush1.bf16.msra.mxu0 0
    %121 = vmatprep.subr.bf16.mxu0 0
    %122 = vmatpush1.bf16.msra.mxu0 0
    %123 = vmatprep.subr.bf16.mxu0 0
    %124 = vmatpush1.bf16.msra.mxu0 0
    %125 = vmatprep.subr.bf16.mxu0 0
    %126 = vmatpush1.bf16.msra.mxu0 0
    %127 = vmatprep.subr.bf16.mxu0 0
    %128 = vmatpush1.bf16.msra.mxu0 0
    %129 = vmatprep.subr.bf16.mxu0 0
    %130 = vmatpush1.bf16.msra.mxu0 0
    %131 = vmatprep.subr.bf16.mxu0 0
    %132 = vmatpush1.bf16.msra.mxu0 0
    %133 = vmatprep.mubr.bf16.mxu0 0
    %134 = vmatmul.mubr.bf16.gmra.mrb[0].mxu0 %v99
    %v135 = vpop.f32.mrb[0].mxu0
    %v136 = vadd.f32 %v89, %v135
    %v137 = vpop.f32.mrb[0].mxu0
    %v138 = vpop.f32.mrb[0].mxu0
    %v139 = vpop.f32.mrb[0].mxu0
    %140 = vdwg.mxu0
    %v141 = vmax.f32 %v136, 0.0
    %v142 = vpack.c.bf16 %v141, %v141
    %v143 = vld [vmem:[#allocation7] sm:$0xf]
    %v144 = vld [vmem:[#allocation7 + $0x4] sm:$0xf]
    %v145 = vld [vmem:[#allocation7 + $0x8] sm:$0xf]
    %v146 = vld [vmem:[#allocation7 + $0xc] sm:$0xf]
    %v147 = vld [vmem:[%s4] sm:$0x1]
    %v149 = vlaneseq
    %v150 = vshrl.u32 %v149, 7
    %v151 = vsub.s32 0, %v150
    %v152 = vrot.slane %v147, %v151
    %v158 = vunpack.c.l.b16 %v143
    %v159 = vunpack.c.l.b16 %v144
    %v160 = vunpack.c.l.b16 %v145
    %v161 = vunpack.c.l.b16 %v146
    %v162 = vpack.c.b16 %v159, %v158
    %v163 = vpack.c.b16 %v161, %v160
    %vm166 = vcmask 261120
    %v168 = vsel %vm166, %v142, 0
    %170 = vmatprep.subr.bf16.mxu0 0
    %171 = vmatpush1.bf16.msra.mxu0 %v162
    %172 = vmatprep.subr.bf16.mxu0 0
    %173 = vmatpush1.bf16.msra.mxu0 %v163
    %174 = vmatprep.subr.bf16.mxu0 0
    %175 = vmatpush1.bf16.msra.mxu0 0
    %176 = vmatprep.subr.bf16.mxu0 0
    %177 = vmatpush1.bf16.msra.mxu0 0
    %178 = vmatprep.subr.bf16.mxu0 0
    %179 = vmatpush1.bf16.msra.mxu0 0
    %180 = vmatprep.subr.bf16.mxu0 0
    %181 = vmatpush1.bf16.msra.mxu0 0
    %182 = vmatprep.subr.bf16.mxu0 0
    %183 = vmatpush1.bf16.msra.mxu0 0
    %184 = vmatprep.subr.bf16.mxu0 0
    %185 = vmatpush1.bf16.msra.mxu0 0
    %186 = vmatprep.subr.bf16.mxu0 0
    %187 = vmatpush1.bf16.msra.mxu0 0
    %188 = vmatprep.subr.bf16.mxu0 0
    %189 = vmatpush1.bf16.msra.mxu0 0
    %190 = vmatprep.subr.bf16.mxu0 0
    %191 = vmatpush1.bf16.msra.mxu0 0
    %192 = vmatprep.subr.bf16.mxu0 0
    %193 = vmatpush1.bf16.msra.mxu0 0
    %194 = vmatprep.subr.bf16.mxu0 0
    %195 = vmatpush1.bf16.msra.mxu0 0
    %196 = vmatprep.subr.bf16.mxu0 0
    %197 = vmatpush1.bf16.msra.mxu0 0
    %198 = vmatprep.subr.bf16.mxu0 0
    %199 = vmatpush1.bf16.msra.mxu0 0
    %200 = vmatprep.subr.bf16.mxu0 0
    %201 = vmatpush1.bf16.msra.mxu0 0
    %202 = vmatprep.mubr.bf16.mxu0 0
    %203 = vmatmul.mubr.bf16.gmra.mrb[0].mxu0 %v168
    %v204 = vpop.f32.mrb[0].mxu0
    %v205 = vadd.f32 %v152, %v204
    %v206 = vpop.f32.mrb[0].mxu0
    %v207 = vpop.f32.mrb[0].mxu0
    %v208 = vpop.f32.mrb[0].mxu0
    %209 = vdwg.mxu0
    %v210 = vmax.f32 %v205, 0.0
    %v211 = vpack.c.bf16 %v210, %v210
    %v212 = vld [vmem:[#allocation8] sm:$0xf]
    %v213 = vld [vmem:[#allocation8 + $0x4] sm:$0xf]
    %v214 = vld [vmem:[#allocation8 + $0x8] sm:$0xf]
    %v215 = vld [vmem:[#allocation8 + $0xc] sm:$0xf]
    %v216 = vld [vmem:[#allocation8 + $0x10] sm:$0xf]
    %v217 = vld [vmem:[#allocation8 + $0x14] sm:$0xf]
    %v218 = vld [vmem:[#allocation8 + $0x18] sm:$0xf]
    %v219 = vld [vmem:[#allocation8 + $0x1c] sm:$0xf]
    %v220 = vld [vmem:[%s6] sm:$0x1]
    %v222 = vlaneseq
    %v223 = vshrl.u32 %v222, 7
    %v224 = vsub.s32 0, %v223
    %v225 = vrot.slane %v220, %v224
    %v235 = vunpack.c.l.b16 %v212
    %v236 = vunpack.c.l.b16 %v213
    %v237 = vunpack.c.l.b16 %v214
    %v238 = vunpack.c.l.b16 %v215
    %v239 = vunpack.c.l.b16 %v216
    %v240 = vunpack.c.l.b16 %v217
    %v241 = vunpack.c.l.b16 %v218
    %v242 = vunpack.c.l.b16 %v219
    %v243 = vpack.c.b16 %v236, %v235
    %v244 = vpack.c.b16 %v238, %v237
    %v245 = vpack.c.b16 %v240, %v239
    %v246 = vpack.c.b16 %v242, %v241
    %vm251 = vcmask 523264
    %v253 = vsel %vm251, %v211, 0
    %255 = vmatprep.subr.bf16.mxu0 0
    %256 = vmatpush1.bf16.msra.mxu0 %v243
    %257 = vmatprep.subr.bf16.mxu0 0
    %258 = vmatpush1.bf16.msra.mxu0 %v244
    %259 = vmatprep.subr.bf16.mxu0 0
    %260 = vmatpush1.bf16.msra.mxu0 %v245
    %261 = vmatprep.subr.bf16.mxu0 0
    %262 = vmatpush1.bf16.msra.mxu0 %v246
    %263 = vmatprep.subr.bf16.mxu0 0
    %264 = vmatpush1.bf16.msra.mxu0 0
    %265 = vmatprep.subr.bf16.mxu0 0
    %266 = vmatpush1.bf16.msra.mxu0 0
    %267 = vmatprep.subr.bf16.mxu0 0
    %268 = vmatpush1.bf16.msra.mxu0 0
    %269 = vmatprep.subr.bf16.mxu0 0
    %270 = vmatpush1.bf16.msra.mxu0 0
    %271 = vmatprep.subr.bf16.mxu0 0
    %272 = vmatpush1.bf16.msra.mxu0 0
    %273 = vmatprep.subr.bf16.mxu0 0
    %274 = vmatpush1.bf16.msra.mxu0 0
    %275 = vmatprep.subr.bf16.mxu0 0
    %276 = vmatpush1.bf16.msra.mxu0 0
    %277 = vmatprep.subr.bf16.mxu0 0
    %278 = vmatpush1.bf16.msra.mxu0 0
    %279 = vmatprep.subr.bf16.mxu0 0
    %280 = vmatpush1.bf16.msra.mxu0 0
    %281 = vmatprep.subr.bf16.mxu0 0
    %282 = vmatpush1.bf16.msra.mxu0 0
    %283 = vmatprep.subr.bf16.mxu0 0
    %284 = vmatpush1.bf16.msra.mxu0 0
    %285 = vmatprep.subr.bf16.mxu0 0
    %286 = vmatpush1.bf16.msra.mxu0 0
    %287 = vmatprep.mubr.bf16.mxu0 0
    %288 = vmatmul.mubr.bf16.gmra.mrb[0].mxu0 %v253
    %v289 = vpop.f32.mrb[0].mxu0
    %v290 = vadd.f32 %v225, %v289
    %v291 = vpop.f32.mrb[0].mxu0
    %v292 = vpop.f32.mrb[0].mxu0
    %v293 = vpop.f32.mrb[0].mxu0
    %294 = vdwg.mxu0
    %295 = vst [vmem:[#allocation10] sm:$0xff] %v290
    // Predicated region
    $region46: #{tpu_custom_call.1} parent=1 // pred_check
      _
    $region47: #{tpu_custom_call.1} parent=1 // pred_check_branch
      %297 = sbr.rel (0) target = $region49
    $region48: #{tpu_custom_call.1} parent=1 // pred_region
      %s299 = ssub.s32 128, 128
      %300 = vsyncadd [#allocation4], %s299
      %s302 = sshll.u32 [#allocation10], 4
      %s303 = int_to_ptr.vmem [resolvable:$true] %s302
      %305 = dma.vmem_to_hbm [thread:$0]  %s303, 128, %s7, [#allocation4]
    $region49: #{tpu_custom_call.1} parent=1 // pred_fallthru
      _
    // Predicated region
    $region50: #{tpu_custom_call.1} parent=1 // pred_check
      _
    $region51: #{tpu_custom_call.1} parent=1 // pred_check_branch
      %307 = sbr.rel (0) target = $region53
    $region52: #{tpu_custom_call.1} parent=1 // pred_region
      %308 = dma.done [#allocation4], 128
    $region53: #{tpu_custom_call.1} parent=1 // pred_fallthru
      _
    %309 = vsyncpa [#allocation3], 1
    %310 = vsyncpa [#allocation6], 1
    %311 = vsyncpa [#allocation9], 1
    %312 = vsyncpa [#allocation4], 1

</llo_original>
